<compile_context>
chip_gen: v7x
topology: tpu7x:2x2x1
jax: 0.10.0
libtpu: 0.0.40
codegen_flags: <defaults>
</compile_context>

<pallas_src>
import jax
import jax.numpy as jnp
from jax.experimental import pallas as pl
from jax.experimental.pallas import tpu as pltpu

_LANES = 128  # TPU vreg lane width


def _identity_kernel(x_ref, o_ref):
    # Whole-array VMEM tile, pass-through store (full-vreg, lane-dense).
    o_ref[...] = x_ref[...]


def _pallas_identity(x: jax.Array) -> jax.Array:
    """Identity copy through a single grid-free, lane-dense Pallas kernel.

    Demo-only: kept to exercise a real Pallas kernel; NOT used by
    `ae_encoder_forward` (the reference forward is empty).
    """
    n = x.size
    if n % _LANES == 0:
        view_shape = (n // _LANES, _LANES)   # lane-dense: last dim = 128
    else:
        view_shape = (1, n)                  # fallback: single full-extent row
    x2 = x.reshape(view_shape)

    y2 = pl.pallas_call(
        _identity_kernel,
        out_shape=jax.ShapeDtypeStruct(view_shape, x.dtype),
        # No grid, no tiling, no index_map: whole array lives in VMEM for the
        # single invocation — skips the auto-pipeline bookkeeping entirely.
        in_specs=[pl.BlockSpec(memory_space=pltpu.MemorySpace.VMEM)],
        out_specs=pl.BlockSpec(memory_space=pltpu.MemorySpace.VMEM),
        # Output buffer aliases the input buffer: identity needs no second
        # HBM allocation / writeback target.
        input_output_aliases={0: 0},
    )(x2)
    return y2.reshape(x.shape)


def ae_encoder_forward(data_train: jax.Array):
    """Faithful port of AE_Encoder.forward: empty body, returns None.

    No kernel is launched here — the reference forward does no work, so any
    Pallas call on this path would be pure launch/DMA overhead.
    """
    del data_train
    return None


if __name__ == "__main__":
    key = jax.random.PRNGKey(0)
    # Small NCHW input consistent with an autoencoder-style module.
    x = jax.random.normal(key, (2, 4, 16, 16), dtype=jnp.float32)

    # Independent reference copy (safe even if the kernel input buffer is
    # aliased/donated to the kernel output).
    x_expected = jnp.copy(x)

    # Exercise the (demo) Pallas kernel once and block on its result.
    y = _pallas_identity(x)
    jax.block_until_ready(y)
    assert y.shape == x.shape and y.dtype == x.dtype
    assert bool(jnp.allclose(y, x_expected)), "identity kernel mismatch"

    # Faithful module forward: returns None, exactly like the PyTorch module.
    out = ae_encoder_forward(x_expected)
    assert out is None

    print("KERNEL_OK")
</pallas_src>

<mosaic_0001>
module attributes {stable_mosaic.version = 11 : i64} {
  func.func @_identity_kernel(%arg0: memref<16x128xf32, #tpu.memory_space<vmem>>, %arg1: memref<16x128xf32, #tpu.memory_space<vmem>>) attributes {dimension_semantics = [], scalar_prefetch = 0 : i64, scratch_operands = 0 : i64, tpu.core_type = #tpu.core_type<tc>} {
    %c0 = arith.constant 0 : index
    %c0_0 = arith.constant 0 : index
    %0 = vector.load %arg0[%c0, %c0_0] : memref<16x128xf32, #tpu.memory_space<vmem>>, vector<16x128xf32>
    %c0_1 = arith.constant 0 : index
    %c0_2 = arith.constant 0 : index
    %1 = vector.load %arg1[%c0_1, %c0_2] : memref<16x128xf32, #tpu.memory_space<vmem>>, vector<16x128xf32>
    tpu.vector_store %arg1[%c0_1, %c0_2], %0 {strides = array<i32>} : memref<16x128xf32, #tpu.memory_space<vmem>>, vector<16x128xf32>,
    return
  }
}

</mosaic_0001>

<llo_original>
// kernel: tpu_custom_call.1
$region0: #{tpu_custom_call.1}
  #allocation0 [shape = 'u32[]', space=smem, size = 0x4, offset = 0x4, fixed_abs, tag = 'smem constant byte address 0x4 - core index']
  #allocation1 [shape = 'u32[144,128]{1,0:T(1,128)}', space=vmem, size = 0x12000, scoped, tag = 'internal scratch']
  %s0 = inlined_call_operand.hbm [shape: f32[16,128], index: 0, kind: input, shape index: {}, may-alias: {0,1}]
  %s1 = inlined_call_operand.hbm [shape: f32[16,128], index: 1, kind: output, shape index: {}, may-alias: {0,1}]
  %s2 = sld [smem:[#allocation0]]
  $region18: #{tpu_custom_call.1} parent=0
    _
  %s4 = ssub.s32 1, %s2
  %s5 = scalar_select 0, %s4, %s2
  $region1: #{tpu_custom_call.1} parent=0
    #allocation2 [shape = 'u8[8192]{0}', space=vmem, size = 0x2000, scoped, tag = 'input window, operand 0, single buffered']
    #allocation3 [shape = 's32[1]{0}', space=sflag, size = 0x4, scoped, tag = 'scoped memory for tpu_custom_call.1']
    #allocation4 [shape = 's32[1]{0}', space=sflag, size = 0x4, scoped, tag = 'scoped memory for tpu_custom_call.1']
    #allocation5 [shape = 'u8[8192]{0}', space=vmem, size = 0x2000, scoped, tag = 'output window, operand 0, single buffered']
    %6 = vsyncpa [#allocation3], 0
    %7 = vsyncpa [#allocation4], 0
    // Predicated region
    $region2: #{tpu_custom_call.1} parent=1 // pred_check
      _
    $region3: #{tpu_custom_call.1} parent=1 // pred_check_branch
      %9 = sbr.rel (0) target = $region5
    $region4: #{tpu_custom_call.1} parent=1 // pred_region
      %s11 = ssub.s32 256, 256
      %12 = vsyncadd [#allocation3], %s11
      %s13 = sshll.u32 [#allocation2], 4
      %s14 = int_to_ptr.vmem [resolvable:$true] %s13
      %19 = dma.hbm_to_vmem [thread:$0]  %s0, 256, %s14, [#allocation3], 128, 128, 8
    $region5: #{tpu_custom_call.1} parent=1 // pred_fallthru
      _
    // Predicated region
    $region6: #{tpu_custom_call.1} parent=1 // pred_check
      _
    $region7: #{tpu_custom_call.1} parent=1 // pred_check_branch
      %21 = sbr.rel (0) target = $region9
    $region8: #{tpu_custom_call.1} parent=1 // pred_region
      %22 = dma.done [#allocation3], 256
    $region9: #{tpu_custom_call.1} parent=1 // pred_fallthru
      _
    %v23 = vld [vmem:[#allocation2] sm:$0xff]
    %v24 = vld [vmem:[#allocation2 + $0x8] sm:$0xff]
    %25 = vst [vmem:[#allocation5] sm:$0xff] %v23
    %26 = vst [vmem:[#allocation5 + $0x8] sm:$0xff] %v24
    // Predicated region
    $region10: #{tpu_custom_call.1} parent=1 // pred_check
      _
    $region11: #{tpu_custom_call.1} parent=1 // pred_check_branch
      %28 = sbr.rel (0) target = $region13
    $region12: #{tpu_custom_call.1} parent=1 // pred_region
      %s30 = ssub.s32 256, 256
      %31 = vsyncadd [#allocation4], %s30
      %s32 = sshll.u32 [#allocation5], 4
      %s33 = int_to_ptr.vmem [resolvable:$true] %s32
      %38 = dma.vmem_to_hbm [thread:$0]  %s33, 256, %s1, [#allocation4], 128, 128, 8
    $region13: #{tpu_custom_call.1} parent=1 // pred_fallthru
      _
    // Predicated region
    $region14: #{tpu_custom_call.1} parent=1 // pred_check
      _
    $region15: #{tpu_custom_call.1} parent=1 // pred_check_branch
      %40 = sbr.rel (0) target = $region17
    $region16: #{tpu_custom_call.1} parent=1 // pred_region
      %41 = dma.done [#allocation4], 256
    $region17: #{tpu_custom_call.1} parent=1 // pred_fallthru
      _
    %42 = vsyncpa [#allocation3], 1
    %43 = vsyncpa [#allocation4], 1

</llo_original>
